<compile_context>
chip_gen: v5e
topology: v5e:2x2
jax: 0.10.0
libtpu: 0.0.40
codegen_flags: <defaults>
</compile_context>

<pallas_src>
import jax
import jax.numpy as jnp
from jax.experimental import pallas as pl
from jax.experimental.pallas import tpu as pltpu

EPS = 1e-6


def _layernorm_f32(x_f32, g, beta):
    """Module's custom LayerNorm (unbiased std, divide by std + eps), in f32."""
    d = x_f32.shape[-1]
    mean = jnp.mean(x_f32, axis=-1, keepdims=True)
    diff = x_f32 - mean
    var_unbiased = jnp.sum(diff * diff, axis=-1, keepdims=True) / (d - 1)
    # One reciprocal per row on the EUP; broadcast across the lane axis.
    rstd = pl.reciprocal(jnp.sqrt(var_unbiased) + EPS, approx=True)
    return g * (diff * rstd) + beta


def _kernel_resident_w(x_ref, w_ref, b_ref, g_ref, beta_ref, o_ref):
    """W fully resident in VMEM (tn == D): LN in registers, dot, residual add."""
    x = x_ref[...].astype(jnp.float32)
    normed = _layernorm_f32(x, g_ref[...], beta_ref[...])
    # Sublayer = dense projection: bf16 operands on the MXU, f32 accumulation.
    y = jnp.dot(normed.astype(jnp.bfloat16), w_ref[...],
                preferred_element_type=jnp.float32) + b_ref[...]
    # Dropout is identity in inference; residual add in f32.
    # TODO(synk): training-mode dropout would need pltpu.prng_* mask generation.
    o_ref[...] = (x + y).astype(o_ref.dtype)


def _kernel_tiled_w(x_ref, xres_ref, w_ref, b_ref, g_ref, beta_ref,
                    o_ref, normed_ref):
    """W tiled over its N axis (large D): LN cached once per row tile."""
    j = pl.program_id(1)

    @pl.when(j == 0)
    def _():
        x = x_ref[...].astype(jnp.float32)
        normed = _layernorm_f32(x, g_ref[...], beta_ref[...])
        # Cast to bf16 only at the MXU boundary; stats stay f32.
        normed_ref[...] = normed.astype(jnp.bfloat16)

    y = jnp.dot(normed_ref[...], w_ref[...],
                preferred_element_type=jnp.float32) + b_ref[...]
    o_ref[...] = (xres_ref[...].astype(jnp.float32) + y).astype(o_ref.dtype)


def _round_up(n, m):
    return pl.cdiv(n, m) * m


def sublayer_connection(x, w, b, gamma, beta, *, tm=256, tn=None,
                        vmem_limit_bytes=48 * 1024 * 1024):
    """SublayerConnection forward: x + dense(LayerNorm(x)); dropout = identity.

    x: [B, S, D]; w: [D, D]; b, gamma (a_2), beta (b_2): [D].
    """
    B, S, D = x.shape
    rows = B * S

    # --- Row tile: large (MXU-friendly, amortizes per-step grid overhead),
    # clamped for tiny inputs; always a multiple of 8 sublanes.
    tm = int(min(tm, _round_up(rows, 8)))
    # Prefer >= 2 row tiles when there is real work (megacore / v7x 2 TCs).
    if pl.cdiv(rows, tm) < 2 and rows >= 256:
        tm = int(_round_up(pl.cdiv(rows, 2), 8))
    rows_pad = int(_round_up(rows, tm))      # <= tm-1 padded rows

    # --- Weight N tile: keep W fully resident while its bf16 copy is small;
    # for very large D tile it over N so x tile + double-buffered W tile fit
    # the v7x 64 MiB VMEM budget.
    if tn is None:
        tn = D if (2 * D * D <= 16 * 1024 * 1024 or D % 1024 != 0) else 1024
    assert tn == D or (D % tn == 0 and tn % 128 == 0)
    n_col = D // tn

    x2 = x.reshape(rows, D)
    if rows_pad != rows:                      # ragged B*S: pad, slice back later
        x2 = jnp.pad(x2, ((0, rows_pad - rows), (0, 0)))

    # bf16 weight for the MXU (halves its VMEM / HBM footprint).
    w_bf16 = w.astype(jnp.bfloat16)
    b2 = b.reshape(1, D).astype(jnp.float32)
    g2 = gamma.reshape(1, D).astype(jnp.float32)
    beta2 = beta.reshape(1, D).astype(jnp.float32)

    if n_col == 1:
        kernel = _kernel_resident_w
        # Constant index maps -> each constant operand is DMA'd from HBM once.
        in_specs = [
            pl.BlockSpec((tm, D), lambda i, j: (i, 0)),   # x rows (LN + residual)
            pl.BlockSpec((D, D), lambda i, j: (0, 0)),    # W (resident)
            pl.BlockSpec((1, D), lambda i, j: (0, 0)),    # bias
            pl.BlockSpec((1, D), lambda i, j: (0, 0)),    # gamma (a_2)
            pl.BlockSpec((1, D), lambda i, j: (0, 0)),    # beta  (b_2)
        ]
        inputs = (x2, w_bf16, b2, g2, beta2)
        scratch_shapes = []
    else:
        kernel = _kernel_tiled_w
        in_specs = [
            pl.BlockSpec((tm, D), lambda i, j: (i, 0)),   # x rows for LayerNorm
            pl.BlockSpec((tm, tn), lambda i, j: (i, j)),  # x N-tile for residual
            pl.BlockSpec((D, tn), lambda i, j: (0, j)),   # W N-tile
            pl.BlockSpec((1, tn), lambda i, j: (0, j)),   # bias N-tile
            pl.BlockSpec((1, D), lambda i, j: (0, 0)),    # gamma (a_2)
            pl.BlockSpec((1, D), lambda i, j: (0, 0)),    # beta  (b_2)
        ]
        inputs = (x2, x2, w_bf16, b2, g2, beta2)
        scratch_shapes = [pltpu.VMEM((tm, D), jnp.bfloat16)]  # cached norm(x)

    out = pl.pallas_call(
        kernel,
        out_shape=jax.ShapeDtypeStruct((rows_pad, D), x.dtype),
        grid_spec=pltpu.PrefetchScalarGridSpec(
            num_scalar_prefetch=0,
            grid=(rows_pad // tm, n_col),
            in_specs=in_specs,
            out_specs=pl.BlockSpec((tm, tn), lambda i, j: (i, j)),
            scratch_shapes=scratch_shapes,
        ),
        compiler_params=pltpu.CompilerParams(
            dimension_semantics=("parallel", "arbitrary"),
            vmem_limit_bytes=vmem_limit_bytes,
        ),
    )(*inputs)

    if rows_pad != rows:
        out = out[:rows]
    return out.reshape(B, S, D)


def _reference(x, w, b, gamma, beta):
    """Pure-JAX f32 reference matching the PyTorch module semantics."""
    x32 = x.astype(jnp.float32)
    d = x32.shape[-1]
    mean = jnp.mean(x32, axis=-1, keepdims=True)
    diff = x32 - mean
    std = jnp.sqrt(jnp.sum(diff * diff, axis=-1, keepdims=True) / (d - 1))
    normed = gamma * diff / (std + EPS) + beta
    y = normed @ w + b
    return (x32 + y).astype(x.dtype)


def _run_case(key, B, S, D, tn=None):
    kx, kw, kb = jax.random.split(key, 3)
    x = jax.random.normal(kx, (B, S, D), dtype=jnp.float32)
    w = jax.random.normal(kw, (D, D), dtype=jnp.float32) * (1.0 / jnp.sqrt(D))
    b = jax.random.normal(kb, (D,), dtype=jnp.float32) * 0.01
    gamma = jnp.ones((D,), dtype=jnp.float32)   # a_2 init
    beta = jnp.zeros((D,), dtype=jnp.float32)   # b_2 init

    out = sublayer_connection(x, w, b, gamma, beta, tn=tn)
    out = jax.block_until_ready(out)
    ref = _reference(x, w, b, gamma, beta)
    # Loose tolerance: bf16 MXU operands + EUP approx reciprocal vs f32 reference.
    assert out.shape == ref.shape
    assert jnp.allclose(out, ref, atol=5e-2, rtol=5e-2), (
        f"mismatch vs reference for shape {(B, S, D)}")


if __name__ == "__main__":
    key = jax.random.PRNGKey(0)
    k1, k2, k3 = jax.random.split(key, 3)

    # Small canonical shape (D on the lane axis), resident-W path.
    _run_case(k1, B=2, S=8, D=128)
    # Ragged B*S (exercises row padding).
    _run_case(k2, B=3, S=5, D=128)
    # Force the N-tiled-W path (exercises the pl.when-cached LayerNorm scratch).
    _run_case(k3, B=2, S=8, D=256, tn=128)

    print("KERNEL_OK")
</pallas_src>

<mosaic_0001>
module attributes {stable_mosaic.version = 11 : i64} {
  func.func @_kernel_resident_w(%arg0: i32, %arg1: i32, %arg2: memref<16x128xf32, #tpu.memory_space<vmem>>, %arg3: memref<128x128xbf16, #tpu.memory_space<vmem>>, %arg4: memref<1x128xf32, #tpu.memory_space<vmem>>, %arg5: memref<1x128xf32, #tpu.memory_space<vmem>>, %arg6: memref<1x128xf32, #tpu.memory_space<vmem>>, %arg7: memref<16x128xf32, #tpu.memory_space<vmem>>) attributes {dimension_semantics = [#tpu.dimension_semantics<parallel>, #tpu.dimension_semantics<arbitrary>], iteration_bounds = array<i64: 1, 1>, scalar_prefetch = 0 : i64, scratch_operands = 0 : i64, tpu.core_type = #tpu.core_type<tc>, window_params = [{transform_indices = @transform_0, window_bounds = array<i64: 16, 128>}, {pipeline_mode = #tpu.pipeline_mode<synchronous>, transform_indices = @transform_1, window_bounds = array<i64: 128, 128>}, {pipeline_mode = #tpu.pipeline_mode<synchronous>, transform_indices = @transform_2, window_bounds = array<i64: 1, 128>}, {pipeline_mode = #tpu.pipeline_mode<synchronous>, transform_indices = @transform_3, window_bounds = array<i64: 1, 128>}, {pipeline_mode = #tpu.pipeline_mode<synchronous>, transform_indices = @transform_4, window_bounds = array<i64: 1, 128>}, {transform_indices = @transform_5, window_bounds = array<i64: 16, 128>}]} {
    %c0 = arith.constant 0 : index
    %c0_0 = arith.constant 0 : index
    %0 = vector.load %arg2[%c0, %c0_0] : memref<16x128xf32, #tpu.memory_space<vmem>>, vector<16x128xf32>
    %c0_1 = arith.constant 0 : index
    %c0_2 = arith.constant 0 : index
    %1 = vector.load %arg5[%c0_1, %c0_2] : memref<1x128xf32, #tpu.memory_space<vmem>>, vector<1x128xf32>
    %c0_3 = arith.constant 0 : index
    %c0_4 = arith.constant 0 : index
    %2 = vector.load %arg6[%c0_3, %c0_4] : memref<1x128xf32, #tpu.memory_space<vmem>>, vector<1x128xf32>
    %cst = arith.constant dense<0.000000e+00> : vector<16xf32>
    %3 = vector.multi_reduction <add>, %0, %cst [1] : vector<16x128xf32> to vector<16xf32>
    %4 = vector.shape_cast %3 : vector<16xf32> to vector<16x1xf32>
    %cst_5 = arith.constant 1.280000e+02 : f32
    %5 = vector.broadcast %cst_5 : f32 to vector<16x1xf32>
    %6 = arith.divf %4, %5 : vector<16x1xf32>
    %7 = vector.broadcast %6 : vector<16x1xf32> to vector<16x128xf32>
    %8 = arith.subf %0, %7 : vector<16x128xf32>
    %9 = arith.mulf %8, %8 : vector<16x128xf32>
    %cst_6 = arith.constant dense<0.000000e+00> : vector<16xf32>
    %10 = vector.multi_reduction <add>, %9, %cst_6 [1] : vector<16x128xf32> to vector<16xf32>
    %11 = vector.shape_cast %10 : vector<16xf32> to vector<16x1xf32>
    %cst_7 = arith.constant 1.270000e+02 : f32
    %12 = vector.broadcast %cst_7 : f32 to vector<16x1xf32>
    %13 = arith.divf %11, %12 : vector<16x1xf32>
    %14 = math.sqrt %13 : vector<16x1xf32>
    %cst_8 = arith.constant 9.99999997E-7 : f32
    %15 = vector.broadcast %cst_8 : f32 to vector<16x1xf32>
    %16 = arith.addf %14, %15 : vector<16x1xf32>
    %17 = tpu.reciprocal %16 {approx = true} : vector<16x1xf32> -> vector<16x1xf32>
    %18 = vector.broadcast %17 : vector<16x1xf32> to vector<16x128xf32>
    %19 = arith.mulf %8, %18 : vector<16x128xf32>
    %20 = vector.broadcast %1 : vector<1x128xf32> to vector<16x128xf32>
    %21 = arith.mulf %20, %19 : vector<16x128xf32>
    %22 = vector.broadcast %2 : vector<1x128xf32> to vector<16x128xf32>
    %23 = arith.addf %21, %22 : vector<16x128xf32>
    %24 = arith.truncf %23 : vector<16x128xf32> to vector<16x128xbf16>
    %c0_9 = arith.constant 0 : index
    %c0_10 = arith.constant 0 : index
    %25 = vector.load %arg3[%c0_9, %c0_10] : memref<128x128xbf16, #tpu.memory_space<vmem>>, vector<128x128xbf16>
    %cst_11 = arith.constant dense<0.000000e+00> : vector<16x128xf32>
    %26 = tpu.matmul %24, %25, %cst_11 {dimension_numbers = #tpu.dot_dimension_numbers<[1], [0], [0], [1], [0, 0, 1, 1], [], []>} : vector<16x128xbf16>, vector<128x128xbf16>, vector<16x128xf32> -> vector<16x128xf32>
    %c0_12 = arith.constant 0 : index
    %c0_13 = arith.constant 0 : index
    %27 = vector.load %arg4[%c0_12, %c0_13] : memref<1x128xf32, #tpu.memory_space<vmem>>, vector<1x128xf32>
    %28 = vector.broadcast %27 : vector<1x128xf32> to vector<16x128xf32>
    %29 = arith.addf %26, %28 : vector<16x128xf32>
    %30 = arith.addf %0, %29 : vector<16x128xf32>
    %c0_14 = arith.constant 0 : index
    %c0_15 = arith.constant 0 : index
    %31 = vector.load %arg7[%c0_14, %c0_15] : memref<16x128xf32, #tpu.memory_space<vmem>>, vector<16x128xf32>
    tpu.vector_store %arg7[%c0_14, %c0_15], %30 {strides = array<i32>} : memref<16x128xf32, #tpu.memory_space<vmem>>, vector<16x128xf32>,
    return
  }
  func.func @transform_0(%arg0: i32, %arg1: i32) -> (i32, i32) {
    %c0_i32 = arith.constant 0 : i32
    %c0_i32_0 = arith.constant 0 : i32
    return %arg0, %c0_i32 : i32, i32
  }
  func.func @transform_1(%arg0: i32, %arg1: i32) -> (i32, i32) {
    %c0_i32 = arith.constant 0 : i32
    %c0_i32_0 = arith.constant 0 : i32
    %c0_i32_1 = arith.constant 0 : i32
    return %c0_i32, %c0_i32_0 : i32, i32
  }
  func.func @transform_2(%arg0: i32, %arg1: i32) -> (i32, i32) {
    %c0_i32 = arith.constant 0 : i32
    %c0_i32_0 = arith.constant 0 : i32
    %c0_i32_1 = arith.constant 0 : i32
    return %c0_i32, %c0_i32_0 : i32, i32
  }
  func.func @transform_3(%arg0: i32, %arg1: i32) -> (i32, i32) {
    %c0_i32 = arith.constant 0 : i32
    %c0_i32_0 = arith.constant 0 : i32
    %c0_i32_1 = arith.constant 0 : i32
    return %c0_i32, %c0_i32_0 : i32, i32
  }
  func.func @transform_4(%arg0: i32, %arg1: i32) -> (i32, i32) {
    %c0_i32 = arith.constant 0 : i32
    %c0_i32_0 = arith.constant 0 : i32
    %c0_i32_1 = arith.constant 0 : i32
    return %c0_i32, %c0_i32_0 : i32, i32
  }
  func.func @transform_5(%arg0: i32, %arg1: i32) -> (i32, i32) {
    %c0_i32 = arith.constant 0 : i32
    return %arg0, %arg1 : i32, i32
  }
}

</mosaic_0001>

<llo_original>
// kernel: tpu_custom_call.1
$region0: #{tpu_custom_call.1}
  #allocation0 [shape = 'u32[]', space=smem, size = 0x4, offset = 0x4, fixed_abs, tag = 'smem constant byte address 0x4 - core index']
  #allocation1 [shape = 'u32[72,128]{1,0:T(1,128)}', space=vmem, size = 0x9000, scoped, tag = 'internal scratch']
  %s0 = inlined_call_operand.hbm [shape: f32[16,128], index: 0, kind: input, shape index: {}]
  %s1 = inlined_call_operand.hbm [shape: bf16[128,128], index: 1, kind: input, shape index: {}]
  %s2 = inlined_call_operand.vmem [shape: f32[1,128], index: 2, kind: input, shape index: {}]
  %s3 = inlined_call_operand.vmem [shape: f32[1,128], index: 3, kind: input, shape index: {}]
  %s4 = inlined_call_operand.vmem [shape: f32[1,128], index: 4, kind: input, shape index: {}]
  %s5 = inlined_call_operand.hbm [shape: f32[16,128], index: 5, kind: output, shape index: {}]
  %s6 = sld [smem:[#allocation0]]
  $region38: #{tpu_custom_call.1} parent=0
    _
  %s8 = ssub.s32 1, %s6
  %s9 = scalar_select 0, %s8, %s6
  $region1: #{tpu_custom_call.1} parent=0
    #allocation2 [shape = 'u8[8192]{0}', space=vmem, size = 0x2000, scoped, tag = 'input window, operand 0, single buffered']
    #allocation3 [shape = 's32[1]{0}', space=sflag, size = 0x4, scoped, tag = 'scoped memory for tpu_custom_call.1']
    #allocation4 [shape = 's32[1]{0}', space=sflag, size = 0x4, scoped, tag = 'scoped memory for tpu_custom_call.1']
    #allocation5 [shape = 'u8[32768]{0}', space=vmem, size = 0x8000, scoped, tag = 'input window, operand 1, single buffered']
    #allocation6 [shape = 's32[1]{0}', space=sflag, size = 0x4, scoped, tag = 'scoped memory for tpu_custom_call.1']
    #allocation7 [shape = 'u8[8192]{0}', space=vmem, size = 0x2000, scoped, tag = 'output window, operand 0, single buffered']
    %10 = vsyncpa [#allocation3], 0
    %11 = vsyncpa [#allocation6], 0
    %12 = vsyncpa [#allocation4], 0
    // Predicated region
    $region2: #{tpu_custom_call.1} parent=1 // pred_check
      _
    $region3: #{tpu_custom_call.1} parent=1 // pred_check_branch
      %14 = sbr.rel (0) target = $region5
    $region4: #{tpu_custom_call.1} parent=1 // pred_region
      %16 = vsyncadd [#allocation3], 0
      %s17 = sshll.u32 %s0, 4
      %s18 = int_to_ptr.hbm [resolvable:$true] %s17
      %s19 = sshll.u32 [#allocation2], 4
      %s20 = int_to_ptr.vmem [resolvable:$true] %s19
      %25 = dma.hbm_to_vmem [thread:$0]  %s18, 256, %s20, [#allocation3], 128, 128, 8
    $region5: #{tpu_custom_call.1} parent=1 // pred_fallthru
      _
    // Predicated region
    $region6: #{tpu_custom_call.1} parent=1 // pred_check
      _
    $region7: #{tpu_custom_call.1} parent=1 // pred_check_branch
      %27 = sbr.rel (0) target = $region9
    $region8: #{tpu_custom_call.1} parent=1 // pred_region
      %29 = vsyncadd [#allocation6], 0
      %s30 = sshll.u32 %s1, 4
      %s31 = int_to_ptr.hbm [resolvable:$true] %s30
      %s32 = sshll.u32 [#allocation5], 4
      %s33 = int_to_ptr.vmem [resolvable:$true] %s32
      %38 = dma.hbm_to_vmem [thread:$0]  %s31, 1024, %s33, [#allocation6], 64, 64, 4
    $region9: #{tpu_custom_call.1} parent=1 // pred_fallthru
      _
    // Predicated region
    $region10: #{tpu_custom_call.1} parent=1 // pred_check
      _
    $region11: #{tpu_custom_call.1} parent=1 // pred_check_branch
      %40 = sbr.rel (0) target = $region13
    $region12: #{tpu_custom_call.1} parent=1 // pred_region
      _
    $region13: #{tpu_custom_call.1} parent=1 // pred_fallthru
      _
    // Predicated region
    $region14: #{tpu_custom_call.1} parent=1 // pred_check
      _
    $region15: #{tpu_custom_call.1} parent=1 // pred_check_branch
      %42 = sbr.rel (0) target = $region17
    $region16: #{tpu_custom_call.1} parent=1 // pred_region
      _
    $region17: #{tpu_custom_call.1} parent=1 // pred_fallthru
      _
    // Predicated region
    $region18: #{tpu_custom_call.1} parent=1 // pred_check
      _
    $region19: #{tpu_custom_call.1} parent=1 // pred_check_branch
      %44 = sbr.rel (0) target = $region21
    $region20: #{tpu_custom_call.1} parent=1 // pred_region
      _
    $region21: #{tpu_custom_call.1} parent=1 // pred_fallthru
      _
    // Predicated region
    $region22: #{tpu_custom_call.1} parent=1 // pred_check
      _
    $region23: #{tpu_custom_call.1} parent=1 // pred_check_branch
      %46 = sbr.rel (0) target = $region25
    $region24: #{tpu_custom_call.1} parent=1 // pred_region
      %48 = dma.done [#allocation3], 256
    $region25: #{tpu_custom_call.1} parent=1 // pred_fallthru
      _
    // Predicated region
    $region26: #{tpu_custom_call.1} parent=1 // pred_check
      _
    $region27: #{tpu_custom_call.1} parent=1 // pred_check_branch
      %50 = sbr.rel (0) target = $region29
    $region28: #{tpu_custom_call.1} parent=1 // pred_region
      %52 = dma.done [#allocation6], 1024
    $region29: #{tpu_custom_call.1} parent=1 // pred_fallthru
      _
    %v53 = vld [vmem:[#allocation2] sm:$0xff]
    %v54 = vld [vmem:[#allocation2 + $0x8] sm:$0xff]
    %v55 = vld [vmem:[%s3] sm:$0x1]
    %v56 = vld [vmem:[%s4] sm:$0x1]
    %57 = vadd.xlane.f32.xlu0 %v53
    %v58 = vpop.xlane.xlu0 %57
    %59 = vadd.xlane.f32.xlu0 %v54
    %v60 = vpop.xlane.xlu0 %59
    %v61 = vrcp.pop 128.0
    %v62 = vmul.f32 128.0, %v61
    %v63 = vsub.f32 1.0, %v62
    %v64 = vmul.f32 %v61, %v63
    %v65 = vadd.f32 %v61, %v64
    %vm66 = vweird.f32 %v61
    %v67 = vsel %vm66, %v61, %v65
    %v68 = vmul.f32 %v58, %v67
    %v69 = vmul.f32 %v60, %v67
    %v70 = vsub.f32 %v53, %v68
    %v71 = vsub.f32 %v54, %v69
    %v72 = vmul.f32 %v70, %v70
    %v73 = vmul.f32 %v71, %v71
    %74 = vadd.xlane.f32.xlu0 %v72
    %v75 = vpop.xlane.xlu0 %74
    %76 = vadd.xlane.f32.xlu0 %v73
    %v77 = vpop.xlane.xlu0 %76
    %v78 = vrcp.pop 127.0
    %v79 = vmul.f32 127.0, %v78
    %v80 = vsub.f32 1.0, %v79
    %v81 = vmul.f32 %v78, %v80
    %v82 = vadd.f32 %v78, %v81
    %vm83 = vweird.f32 %v78
    %v84 = vsel %vm83, %v78, %v82
    %v85 = vmul.f32 %v75, %v84
    %v86 = vmul.f32 %v77, %v84
    %v87 = vrsqrt.pop %v85
    %v88 = vmul.f32 %v87, %v85
    %v89 = vmul.f32 %v88, %v87
    %v90 = vmul.f32 0.5, %v89
    %v91 = vsub.f32 1.5, %v90
    %v92 = vmul.f32 %v87, %v91
    %v93 = vmul.f32 %v85, %v92
    %vm94 = vcmp.eq.f32.partialorder %v85, inf
    %v95 = vsel %vm94, %v85, %v93
    %vm96 = vcmp.eq.f32.partialorder %v85, 0.0
    %v97 = vand.u32 %v85, 2147483648
    %v98 = vsel %vm96, %v97, %v95
    %v99 = vrsqrt.pop %v86
    %v100 = vmul.f32 %v99, %v86
    %v101 = vmul.f32 %v100, %v99
    %v102 = vmul.f32 0.5, %v101
    %v103 = vsub.f32 1.5, %v102
    %v104 = vmul.f32 %v99, %v103
    %v105 = vmul.f32 %v86, %v104
    %vm106 = vcmp.eq.f32.partialorder %v86, inf
    %v107 = vsel %vm106, %v86, %v105
    %vm108 = vcmp.eq.f32.partialorder %v86, 0.0
    %v109 = vand.u32 %v86, 2147483648
    %v110 = vsel %vm108, %v109, %v107
    %v111 = vadd.f32 %v98, 1e-06
    %v112 = vadd.f32 %v110, 1e-06
    %v113 = vrcp.pop %v111
    %v114 = vrcp.pop %v112
    %v115 = vmul.f32 %v70, %v113
    %v116 = vmul.f32 %v71, %v114
    %v118 = vperm.slane %v55, 0
    %v120 = vmul.f32 %v118, %v115
    %v121 = vmul.f32 %v118, %v116
    %v123 = vperm.slane %v56, 0
    %v125 = vadd.f32 %v120, %v123
    %v126 = vadd.f32 %v121, %v123
    %v127 = vpack.c.bf16 %v126, %v125
    %v128 = vld [vmem:[#allocation5] sm:$0xf]
    %v129 = vld [vmem:[#allocation5 + $0x4] sm:$0xf]
    %v130 = vld [vmem:[#allocation5 + $0x8] sm:$0xf]
    %v131 = vld [vmem:[#allocation5 + $0xc] sm:$0xf]
    %v132 = vld [vmem:[#allocation5 + $0x10] sm:$0xf]
    %v133 = vld [vmem:[#allocation5 + $0x14] sm:$0xf]
    %v134 = vld [vmem:[#allocation5 + $0x18] sm:$0xf]
    %v135 = vld [vmem:[#allocation5 + $0x1c] sm:$0xf]
    %v136 = vld [vmem:[#allocation5 + $0x20] sm:$0xf]
    %v137 = vld [vmem:[#allocation5 + $0x24] sm:$0xf]
    %v138 = vld [vmem:[#allocation5 + $0x28] sm:$0xf]
    %v139 = vld [vmem:[#allocation5 + $0x2c] sm:$0xf]
    %v140 = vld [vmem:[#allocation5 + $0x30] sm:$0xf]
    %v141 = vld [vmem:[#allocation5 + $0x34] sm:$0xf]
    %v142 = vld [vmem:[#allocation5 + $0x38] sm:$0xf]
    %v143 = vld [vmem:[#allocation5 + $0x3c] sm:$0xf]
    %v144 = vld [vmem:[%s2] sm:$0x1]
    %v146 = vperm.slane %v144, 0
    %v164 = vunpack.c.l.b16 %v128
    %v165 = vunpack.c.l.b16 %v129
    %v166 = vunpack.c.l.b16 %v130
    %v167 = vunpack.c.l.b16 %v131
    %v168 = vunpack.c.l.b16 %v132
    %v169 = vunpack.c.l.b16 %v133
    %v170 = vunpack.c.l.b16 %v134
    %v171 = vunpack.c.l.b16 %v135
    %v172 = vunpack.c.l.b16 %v136
    %v173 = vunpack.c.l.b16 %v137
    %v174 = vunpack.c.l.b16 %v138
    %v175 = vunpack.c.l.b16 %v139
    %v176 = vunpack.c.l.b16 %v140
    %v177 = vunpack.c.l.b16 %v141
    %v178 = vunpack.c.l.b16 %v142
    %v179 = vunpack.c.l.b16 %v143
    %v180 = vpack.c.b16 %v165, %v164
    %v181 = vpack.c.b16 %v167, %v166
    %v182 = vpack.c.b16 %v169, %v168
    %v183 = vpack.c.b16 %v171, %v170
    %v184 = vpack.c.b16 %v173, %v172
    %v185 = vpack.c.b16 %v175, %v174
    %v186 = vpack.c.b16 %v177, %v176
    %v187 = vpack.c.b16 %v179, %v178
    %196 = vmatpush.bf16.msra.mxu0 %v187
    %197 = vmatpush.bf16.msra.mxu0 %v186
    %198 = vmatpush.bf16.msra.mxu0 %v185
    %199 = vmatpush.bf16.msra.mxu0 %v184
    %200 = vmatpush.bf16.msra.mxu0 %v183
    %201 = vmatpush.bf16.msra.mxu0 %v182
    %202 = vmatpush.bf16.msra.mxu0 %v181
    %203 = vmatpush.bf16.msra.mxu0 %v180
    %204 = vmatmul.bf16.gmra.mxu0 %v127
    %v205 = vpop.f32.mrf.mxu0
    %v206 = vadd.f32 %v146, %v205
    %v207 = vpop.f32.mrf.mxu0
    %v208 = vadd.f32 %v146, %v207
    %209 = vdwg.mxu0
    %v210 = vadd.f32 %v53, %v206
    %v211 = vadd.f32 %v54, %v208
    %212 = vst [vmem:[#allocation7] sm:$0xff] %v210
    %213 = vst [vmem:[#allocation7 + $0x8] sm:$0xff] %v211
    // Predicated region
    $region30: #{tpu_custom_call.1} parent=1 // pred_check
      _
    $region31: #{tpu_custom_call.1} parent=1 // pred_check_branch
      %215 = sbr.rel (0) target = $region33
    $region32: #{tpu_custom_call.1} parent=1 // pred_region
      %217 = vsyncadd [#allocation4], 0
      %s218 = sshll.u32 [#allocation7], 4
      %s219 = int_to_ptr.vmem [resolvable:$true] %s218
      %s220 = sshll.u32 %s5, 4
      %s221 = int_to_ptr.hbm [resolvable:$true] %s220
      %226 = dma.vmem_to_hbm [thread:$0]  %s219, 256, %s221, [#allocation4], 128, 128, 8
    $region33: #{tpu_custom_call.1} parent=1 // pred_fallthru
      _
    // Predicated region
    $region34: #{tpu_custom_call.1} parent=1 // pred_check
      _
    $region35: #{tpu_custom_call.1} parent=1 // pred_check_branch
      %228 = sbr.rel (0) target = $region37
    $region36: #{tpu_custom_call.1} parent=1 // pred_region
      %230 = dma.done [#allocation4], 256
    $region37: #{tpu_custom_call.1} parent=1 // pred_fallthru
      _
    %231 = vsyncpa [#allocation3], 1
    %232 = vsyncpa [#allocation6], 1
    %233 = vsyncpa [#allocation4], 1

</llo_original>
